<compile_context>
chip_gen: v7x
topology: tpu7x:2x2x1
jax: 0.10.0
libtpu: 0.0.40
codegen_flags: <defaults>
</compile_context>

<pallas_src>
import jax
import jax.numpy as jnp
from jax.experimental import pallas as pl
from jax.experimental.pallas import tpu as pltpu


def _round_up(x, m):
    return ((x + m - 1) // m) * m


def _actnorm_kernel(x_ref, scale_ref, loc_ref, o_ref):
    # x_ref:     (RB, LB)  tile of the (N*C, H*W) view of the input
    # scale_ref: (RB, 1)   per-row (= per-channel) scale, broadcast over lanes
    # loc_ref:   (RB, 1)   per-row loc, broadcast over lanes
    x = x_ref[...].astype(jnp.float32)
    o_ref[...] = (scale_ref[...] * (x + loc_ref[...])).astype(o_ref.dtype)


def make_param_rows(loc, scale, num_batch):
    """Expand (1, C, 1, 1) parameters into f32 (N*C, 1) columns.

    Tiny, but a separate XLA op — compute it once per (params, batch-size) and reuse
    via the `param_rows=` kwarg of actnorm_forward to avoid per-call glue overhead.
    """
    C = loc.shape[1]
    loc_rows = jnp.broadcast_to(
        loc.reshape(1, C, 1).astype(jnp.float32), (num_batch, C, 1)
    ).reshape(num_batch * C, 1)
    scale_rows = jnp.broadcast_to(
        scale.reshape(1, C, 1).astype(jnp.float32), (num_batch, C, 1)
    ).reshape(num_batch * C, 1)
    return loc_rows, scale_rows


def actnorm_forward(
    x,
    loc,
    scale,
    logdet=False,
    *,
    row_block=128,
    lane_block=16384,
    block_bytes=4 << 20,   # ~4 MiB per pipelined buffer, dtype-independent
    param_rows=None,
):
    """ActNorm forward.

    x:          (N, C, H, W) activations (or (N, C), matching the module's squeeze path)
    loc, scale: (1, C, 1, 1) parameters (compute is done in float32)
    param_rows: optional precomputed (loc_rows, scale_rows) from make_param_rows().
    """
    squeeze = False
    if x.ndim == 2:
        x = x[:, :, None, None]
        squeeze = True
    N, C, H, W = x.shape
    R, L = N * C, H * W

    # Free, contiguous view of NCHW: rows = (n, c) pairs, lanes = spatial positions.
    x2 = x.reshape(R, L)
    itemsize = x2.dtype.itemsize

    if param_rows is None:
        loc_rows, scale_rows = make_param_rows(loc, scale, N)
    else:
        loc_rows, scale_rows = param_rows

    # ---- block-size selection (dtype-aware, byte-budget driven) -------------------
    sub = max(8, 32 // itemsize)          # sublane multiple: f32 -> 8, bf16 -> 16, int8 -> 32
    L_pad = _round_up(L, 128)
    RB = min(_round_up(row_block, sub), _round_up(R, sub))
    if RB * L_pad * itemsize <= block_bytes:
        # Full rows fit the budget: each tile DMA is one contiguous stream and the
        # lane grid axis collapses to a single block.
        LB = L
    else:
        LB = max(128, (block_bytes // (RB * itemsize)) // 128 * 128)
        LB = min(LB, _round_up(lane_block, 128), L_pad)

    # v7x megacore: for non-trivial tensors make sure the parallel grid has >=2 blocks
    # on at least one axis so both TensorCores get work.
    if pl.cdiv(R, RB) == 1 and pl.cdiv(L, LB) == 1 and R * L * itemsize >= (1 << 20):
        if L > 128:
            LB = _round_up((L + 1) // 2, 128)
        elif R > sub:
            RB = _round_up((R + 1) // 2, sub)

    grid = (pl.cdiv(R, RB), pl.cdiv(L, LB))

    # ---- explicit VMEM budget (portable across v5e/v6e/v7x scoped defaults) -------
    LB_pad = _round_up(LB, 128)
    data_tile = RB * LB_pad * itemsize         # one input (== one output) tile
    param_tile = RB * 128 * 4                  # (RB, 1) f32 column pads to 128 lanes
    vmem_limit = 4 * data_tile + 4 * param_tile + (2 << 20)   # 2x in + 2x out + params + slack
    vmem_limit = int(min(vmem_limit, 60 << 20))

    bytes_x = R * L * itemsize
    cost = pl.CostEstimate(
        flops=2 * R * L,
        transcendentals=0,
        bytes_accessed=2 * bytes_x + 2 * R * 4,
    )

    out = pl.pallas_call(
        _actnorm_kernel,
        out_shape=jax.ShapeDtypeStruct((R, L), x2.dtype),
        grid_spec=pltpu.PrefetchScalarGridSpec(
            num_scalar_prefetch=0,
            grid=grid,
            in_specs=[
                pl.BlockSpec((RB, LB), lambda i, j: (i, j)),  # x tile
                pl.BlockSpec((RB, 1), lambda i, j: (i, 0)),   # scale: steps with rows only
                pl.BlockSpec((RB, 1), lambda i, j: (i, 0)),   # loc:   steps with rows only
            ],
            out_specs=pl.BlockSpec((RB, LB), lambda i, j: (i, j)),
        ),
        compiler_params=pltpu.CompilerParams(
            dimension_semantics=("parallel", "parallel"),
            vmem_limit_bytes=vmem_limit,
        ),
        cost_estimate=cost,
    )(x2, scale_rows, loc_rows)

    h = out.reshape(N, C, H, W)
    if squeeze:
        h = h[:, :, 0, 0]

    if logdet:
        # Tiny parameter-only reduction (C elements) -> plain JAX glue, not a hot path.
        # Kept in float32 (PyTorch's f32-parameter math promotes the product to f32).
        log_abs = jnp.log(jnp.abs(scale.reshape(C).astype(jnp.float32)))
        ld = (H * W) * jnp.sum(log_abs) * jnp.ones((N,), jnp.float32)
        return h, ld
    return h


if __name__ == "__main__":
    key = jax.random.PRNGKey(0)
    k_x, k_s, k_l, k_x2 = jax.random.split(key, 4)

    N, C, H, W = 2, 4, 16, 16
    x = jax.random.normal(k_x, (N, C, H, W), dtype=jnp.float32)

    # Parameters per module __init__: loc zeros(1,C,1,1), scale ones(1,C,1,1).
    # Perturb deterministically so the kernel does non-trivial work.
    loc = jnp.zeros((1, C, 1, 1), jnp.float32) + 0.1 * jax.random.normal(k_l, (1, C, 1, 1))
    scale = jnp.ones((1, C, 1, 1), jnp.float32) + 0.1 * jax.random.normal(k_s, (1, C, 1, 1))

    # 4-D path with logdet.
    h, ld = actnorm_forward(x, loc, scale, logdet=True)
    h = jax.block_until_ready(h)
    ld = jax.block_until_ready(ld)

    h_ref = scale * (x + loc)
    ld_ref = H * W * jnp.sum(jnp.log(jnp.abs(scale))) * jnp.ones((N,), jnp.float32)
    assert h.shape == (N, C, H, W) and ld.shape == (N,)
    assert jnp.allclose(h, h_ref, atol=1e-6, rtol=1e-6)
    assert jnp.allclose(ld, ld_ref, atol=1e-6, rtol=1e-6)

    # 2-D squeeze path (input of shape (N, C)).
    x2d = jax.random.normal(k_x2, (N, C), dtype=jnp.float32)
    h2d = jax.block_until_ready(actnorm_forward(x2d, loc, scale, logdet=False))
    h2d_ref = (scale * (x2d[:, :, None, None] + loc))[:, :, 0, 0]
    assert h2d.shape == (N, C)
    assert jnp.allclose(h2d, h2d_ref, atol=1e-6, rtol=1e-6)

    # TODO(synk): the training-time data-dependent initialize() and the reverse() path
    # are not implemented (forward/inference semantics only).
    print("KERNEL_OK")
</pallas_src>

<mosaic_0001>
module attributes {stable_mosaic.version = 11 : i64} {
  func.func @_actnorm_kernel(%arg0: i32, %arg1: i32, %arg2: memref<8x256xf32, #tpu.memory_space<vmem>>, %arg3: memref<8x1xf32, #tpu.memory_space<vmem>>, %arg4: memref<8x1xf32, #tpu.memory_space<vmem>>, %arg5: memref<8x256xf32, #tpu.memory_space<vmem>>) attributes {dimension_semantics = [#tpu.dimension_semantics<parallel>, #tpu.dimension_semantics<parallel>], iteration_bounds = array<i64: 1, 1>, scalar_prefetch = 0 : i64, scratch_operands = 0 : i64, tpu.core_type = #tpu.core_type<tc>, window_params = [{transform_indices = @transform_0, window_bounds = array<i64: 8, 256>}, {transform_indices = @transform_1, window_bounds = array<i64: 8, 1>}, {transform_indices = @transform_2, window_bounds = array<i64: 8, 1>}, {transform_indices = @transform_3, window_bounds = array<i64: 8, 256>}]} {
    %c0 = arith.constant 0 : index
    %c0_0 = arith.constant 0 : index
    %0 = vector.load %arg2[%c0, %c0_0] : memref<8x256xf32, #tpu.memory_space<vmem>>, vector<8x256xf32>
    %c0_1 = arith.constant 0 : index
    %c0_2 = arith.constant 0 : index
    %1 = vector.load %arg3[%c0_1, %c0_2] : memref<8x1xf32, #tpu.memory_space<vmem>>, vector<8x1xf32>
    %c0_3 = arith.constant 0 : index
    %c0_4 = arith.constant 0 : index
    %2 = vector.load %arg4[%c0_3, %c0_4] : memref<8x1xf32, #tpu.memory_space<vmem>>, vector<8x1xf32>
    %3 = vector.broadcast %2 : vector<8x1xf32> to vector<8x256xf32>
    %4 = arith.addf %0, %3 : vector<8x256xf32>
    %5 = vector.broadcast %1 : vector<8x1xf32> to vector<8x256xf32>
    %6 = arith.mulf %5, %4 : vector<8x256xf32>
    %c0_5 = arith.constant 0 : index
    %c0_6 = arith.constant 0 : index
    %7 = vector.load %arg5[%c0_5, %c0_6] : memref<8x256xf32, #tpu.memory_space<vmem>>, vector<8x256xf32>
    tpu.vector_store %arg5[%c0_5, %c0_6], %6 {strides = array<i32>} : memref<8x256xf32, #tpu.memory_space<vmem>>, vector<8x256xf32>,
    return
  }
  func.func @transform_0(%arg0: i32, %arg1: i32) -> (i32, i32) {
    %c0_i32 = arith.constant 0 : i32
    return %arg0, %arg1 : i32, i32
  }
  func.func @transform_1(%arg0: i32, %arg1: i32) -> (i32, i32) {
    %c0_i32 = arith.constant 0 : i32
    %c0_i32_0 = arith.constant 0 : i32
    return %arg0, %c0_i32 : i32, i32
  }
  func.func @transform_2(%arg0: i32, %arg1: i32) -> (i32, i32) {
    %c0_i32 = arith.constant 0 : i32
    %c0_i32_0 = arith.constant 0 : i32
    return %arg0, %c0_i32 : i32, i32
  }
  func.func @transform_3(%arg0: i32, %arg1: i32) -> (i32, i32) {
    %c0_i32 = arith.constant 0 : i32
    return %arg0, %arg1 : i32, i32
  }
}

</mosaic_0001>

<llo_original>
// kernel: tpu_custom_call.1
$region0: #{tpu_custom_call.1}
  #allocation0 [shape = 'u32[]', space=smem, size = 0x4, offset = 0x4, fixed_abs, tag = 'smem constant byte address 0x4 - core index']
  #allocation1 [shape = 'u32[144,128]{1,0:T(1,128)}', space=vmem, size = 0x12000, scoped, tag = 'internal scratch']
  %s0 = inlined_call_operand.vmem [shape: f32[8,256], index: 0, kind: input, shape index: {}]
  %s1 = inlined_call_operand.vmem [shape: f32[8,1], index: 1, kind: input, shape index: {}]
  %s2 = inlined_call_operand.vmem [shape: f32[8,1], index: 2, kind: input, shape index: {}]
  %s3 = inlined_call_operand.hbm [shape: f32[8,256], index: 3, kind: output, shape index: {}]
  %s4 = sld [smem:[#allocation0]]
  $region22: #{tpu_custom_call.1} parent=0
    _
  %s6 = ssub.s32 1, %s4
  %s7 = scalar_select 0, %s6, %s4
  $region1: #{tpu_custom_call.1} parent=0
    #allocation2 [shape = 'u8[8192]{0}', space=vmem, size = 0x2000, scoped, tag = 'output window, operand 0, single buffered']
    #allocation3 [shape = 's32[1]{0}', space=sflag, size = 0x4, scoped, tag = 'scoped memory for tpu_custom_call.1']
    %8 = vsyncpa [#allocation3], 0
    // Predicated region
    $region2: #{tpu_custom_call.1} parent=1 // pred_check
      _
    $region3: #{tpu_custom_call.1} parent=1 // pred_check_branch
      %10 = sbr.rel (0) target = $region5
    $region4: #{tpu_custom_call.1} parent=1 // pred_region
      _
    $region5: #{tpu_custom_call.1} parent=1 // pred_fallthru
      _
    // Predicated region
    $region6: #{tpu_custom_call.1} parent=1 // pred_check
      _
    $region7: #{tpu_custom_call.1} parent=1 // pred_check_branch
      %12 = sbr.rel (0) target = $region9
    $region8: #{tpu_custom_call.1} parent=1 // pred_region
      _
    $region9: #{tpu_custom_call.1} parent=1 // pred_fallthru
      _
    // Predicated region
    $region10: #{tpu_custom_call.1} parent=1 // pred_check
      _
    $region11: #{tpu_custom_call.1} parent=1 // pred_check_branch
      %14 = sbr.rel (0) target = $region13
    $region12: #{tpu_custom_call.1} parent=1 // pred_region
      _
    $region13: #{tpu_custom_call.1} parent=1 // pred_fallthru
      _
    %v15 = vld [vmem:[%s0] sm:$0xff]
    %v16 = vld [vmem:[%s0 + $0x8] sm:$0xff]
    %v17 = vld [vmem:[%s1] sm:$0xff]
    %v18 = vld [vmem:[%s2] sm:$0xff]
    %20 = vset.pattern.permute.xlu0 0
    %21 = vperm.xlu0 %20, %v18
    %v22 = vpop.permute.xlu0 %21
    %v24 = vadd.f32 %v15, %v22
    %v25 = vadd.f32 %v16, %v22
    %27 = vset.pattern.permute.xlu0 0
    %28 = vperm.xlu0 %27, %v17
    %v29 = vpop.permute.xlu0 %28
    %v31 = vmul.f32 %v29, %v24
    %v32 = vmul.f32 %v29, %v25
    %33 = vst [vmem:[#allocation2] sm:$0xff] %v31
    %34 = vst [vmem:[#allocation2 + $0x8] sm:$0xff] %v32
    // Predicated region
    $region14: #{tpu_custom_call.1} parent=1 // pred_check
      _
    $region15: #{tpu_custom_call.1} parent=1 // pred_check_branch
      %36 = sbr.rel (0) target = $region17
    $region16: #{tpu_custom_call.1} parent=1 // pred_region
      %s38 = ssub.s32 256, 256
      %39 = vsyncadd [#allocation3], %s38
      %s41 = sshll.u32 [#allocation2], 4
      %s42 = int_to_ptr.vmem [resolvable:$true] %s41
      %44 = dma.vmem_to_hbm [thread:$0]  %s42, 256, %s3, [#allocation3]
    $region17: #{tpu_custom_call.1} parent=1 // pred_fallthru
      _
    // Predicated region
    $region18: #{tpu_custom_call.1} parent=1 // pred_check
      _
    $region19: #{tpu_custom_call.1} parent=1 // pred_check_branch
      %46 = sbr.rel (0) target = $region21
    $region20: #{tpu_custom_call.1} parent=1 // pred_region
      %47 = dma.done [#allocation3], 256
    $region21: #{tpu_custom_call.1} parent=1 // pred_fallthru
      _
    %48 = vsyncpa [#allocation3], 1

</llo_original>
